<compile_context>
chip_gen: v7x
topology: tpu7x:2x2x1
jax: 0.10.0
libtpu: 0.0.40
codegen_flags: <defaults>
</compile_context>

<pallas_src>
import functools
import math

import jax
import jax.numpy as jnp
from jax.experimental import pallas as pl
from jax.experimental.pallas import tpu as pltpu


def _round_up(x, m):
    return -(-x // m) * m


# ----------------------------------------------------------------------------
# 1. Linear (matmul + bias) kernel:  y = x @ w + b
# ----------------------------------------------------------------------------
def _linear_kernel(x_ref, w_ref, b_ref, o_ref):
    acc = jnp.dot(x_ref[...], w_ref[...], preferred_element_type=jnp.float32)
    o_ref[...] = (acc + b_ref[...].astype(jnp.float32)).astype(o_ref.dtype)


def linear_pallas(x, w, b):
    """x: (M, K), w: (K, N) (already transposed from torch (N, K)), b: (N,)."""
    M, K = x.shape
    K2, N = w.shape
    assert K == K2
    Mp = _round_up(M, 8)
    tm = next(c for c in (512, 256, 128, 64, 32, 16, 8) if Mp % c == 0)
    if Mp != M:
        x = jnp.pad(x, ((0, Mp - M), (0, 0)))
    b2 = b.reshape(1, N)
    out = pl.pallas_call(
        _linear_kernel,
        out_shape=jax.ShapeDtypeStruct((Mp, N), x.dtype),
        grid=(Mp // tm,),
        in_specs=[
            pl.BlockSpec((tm, K), lambda i: (i, 0)),
            pl.BlockSpec((K, N), lambda i: (0, 0)),
            pl.BlockSpec((1, N), lambda i: (0, 0)),
        ],
        out_specs=pl.BlockSpec((tm, N), lambda i: (i, 0)),
        compiler_params=pltpu.CompilerParams(dimension_semantics=("parallel",)),
    )(x, w, b2)
    return out[:M]


# ----------------------------------------------------------------------------
# 2. PhiRotaryEmbedding cos/sin cache kernel (lane-dense slab layout)
# ----------------------------------------------------------------------------
def _rope_cache_kernel(coef_ref, cos_ref, sin_ref, *, dim, half, pos_per_row):
    shape = cos_ref.shape  # (row_tile, pos_per_row * dim)
    row = jax.lax.broadcasted_iota(jnp.int32, shape, 0)
    lane = jax.lax.broadcasted_iota(jnp.int32, shape, 1)
    global_row = pl.program_id(0) * shape[0] + row
    # row-major slab: lane l of slab-row r holds position r*pos_per_row + l//dim,
    # rotary channel l % dim; inv_freq index = (l % dim) % half == l % half.
    pos = (global_row * pos_per_row + lane // dim).astype(jnp.float32)
    j = (lane % half).astype(jnp.float32)
    inv_freq = jnp.exp(j * coef_ref[0])          # base**(-2*j/dim)
    emb = pos * inv_freq
    cos_ref[...] = jnp.cos(emb).astype(cos_ref.dtype)
    sin_ref[...] = jnp.sin(emb).astype(sin_ref.dtype)


def phi_rotary_cache(dim, seq_len, base=10000.0, dtype=jnp.float32):
    """Returns (cos, sin), each of shape (seq_len, dim) in `dtype`."""
    assert dim % 2 == 0
    half = dim // 2
    pos_per_row = 128 // dim if (dim <= 128 and 128 % dim == 0) else 1
    width = pos_per_row * dim
    rows = -(-seq_len // pos_per_row)
    row_tile = 1024
    while row_tile > 8 and row_tile * 2 > rows:   # keep >=2 steps when there is work
        row_tile //= 2
    row_tile = max(row_tile, 8)
    rows_p = _round_up(rows, row_tile)

    coef = jnp.full((1,), -2.0 * math.log(float(base)) / dim, dtype=jnp.float32)
    kernel = functools.partial(
        _rope_cache_kernel, dim=dim, half=half, pos_per_row=pos_per_row)

    cos, sin = pl.pallas_call(
        kernel,
        out_shape=(
            jax.ShapeDtypeStruct((rows_p, width), dtype),
            jax.ShapeDtypeStruct((rows_p, width), dtype),
        ),
        grid=(rows_p // row_tile,),
        in_specs=[pl.BlockSpec(memory_space=pltpu.MemorySpace.SMEM)],
        out_specs=(
            pl.BlockSpec((row_tile, width), lambda i: (i, 0)),
            pl.BlockSpec((row_tile, width), lambda i: (i, 0)),
        ),
        compiler_params=pltpu.CompilerParams(dimension_semantics=("parallel",)),
    )(coef)

    cos = cos.reshape(rows_p * pos_per_row, dim)[:seq_len]
    sin = sin.reshape(rows_p * pos_per_row, dim)[:seq_len]
    return cos, sin


# ----------------------------------------------------------------------------
# 3. Attention kernel: partial RoPE + scaled dot-product attention per (b, h)
# ----------------------------------------------------------------------------
def _phi_attention_kernel(q_ref, k_ref, v_ref, cos_ref, sin_ref, mask_ref, o_ref,
                          *, scale, rot_dim):
    q = q_ref[...].astype(jnp.float32)          # (S, D)
    k = k_ref[...].astype(jnp.float32)          # (S, D)
    v = v_ref[...]                              # (S, D)
    cos = cos_ref[...].astype(jnp.float32)      # (S, rot_dim)
    sin = sin_ref[...].astype(jnp.float32)
    half = rot_dim // 2

    def apply_rope(t):
        t_rot = t[:, :rot_dim]
        rotated = jnp.concatenate([-t_rot[:, half:], t_rot[:, :half]], axis=-1)
        t_rot = t_rot * cos + rotated * sin
        if rot_dim == t.shape[-1]:
            return t_rot
        return jnp.concatenate([t_rot, t[:, rot_dim:]], axis=-1)

    q = apply_rope(q)
    k = apply_rope(k)

    # scores = (q @ k^T) * scale  (fp32, like the reference)
    s = jax.lax.dot_general(q, k, (((1,), (1,)), ((), ())),
                            preferred_element_type=jnp.float32) * scale
    s = s + mask_ref[...].astype(jnp.float32)
    s = s - jnp.max(s, axis=-1, keepdims=True)
    p = jnp.exp(s)
    p = p / jnp.sum(p, axis=-1, keepdims=True)
    o = jnp.dot(p.astype(v.dtype), v, preferred_element_type=jnp.float32)
    o_ref[...] = o.astype(o_ref.dtype)


def phi_attention_core(q, k, v, cos_sel, sin_sel, mask, *, scale, rot_dim):
    B, Hq, S, D = q.shape
    Hkv = k.shape[1]
    n_rep = Hq // Hkv
    kernel = functools.partial(_phi_attention_kernel, scale=scale, rot_dim=rot_dim)
    return pl.pallas_call(
        kernel,
        out_shape=jax.ShapeDtypeStruct((B, Hq, S, D), q.dtype),
        grid=(B, Hq),
        in_specs=[
            pl.BlockSpec((None, None, S, D), lambda b, h: (b, h, 0, 0)),
            # repeat_kv expressed through the index_map: head h uses kv head h//n_rep
            pl.BlockSpec((None, None, S, D), lambda b, h: (b, h // n_rep, 0, 0)),
            pl.BlockSpec((None, None, S, D), lambda b, h: (b, h // n_rep, 0, 0)),
            pl.BlockSpec((None, S, rot_dim), lambda b, h: (b, 0, 0)),
            pl.BlockSpec((None, S, rot_dim), lambda b, h: (b, 0, 0)),
            pl.BlockSpec((None, None, S, S), lambda b, h: (b, 0, 0, 0)),
        ],
        out_specs=pl.BlockSpec((None, None, S, D), lambda b, h: (b, h, 0, 0)),
        compiler_params=pltpu.CompilerParams(
            dimension_semantics=("parallel", "parallel")),
    )(q, k, v, cos_sel, sin_sel, mask)


# ----------------------------------------------------------------------------
# PhiAttention forward
# ----------------------------------------------------------------------------
def phi_attention_forward(params, hidden_states, attention_mask=None,
                          position_ids=None, *, num_heads, num_kv_heads,
                          rope_theta=10000.0, partial_rotary_factor=0.5):
    B, S, hidden = hidden_states.shape
    head_dim = hidden // num_heads
    rot_dim = int(partial_rotary_factor * head_dim)
    n_rep = num_heads // num_kv_heads
    assert num_heads * head_dim == hidden and num_kv_heads * n_rep == num_heads

    x2 = hidden_states.reshape(B * S, hidden)
    q = linear_pallas(x2, params["wq"].T, params["bq"])
    k = linear_pallas(x2, params["wk"].T, params["bk"])
    v = linear_pallas(x2, params["wv"].T, params["bv"])
    # TODO(synk): qk_layernorm path (config.qk_layernorm, default False) not implemented.

    q = q.reshape(B, S, num_heads, head_dim).transpose(0, 2, 1, 3)
    k = k.reshape(B, S, num_kv_heads, head_dim).transpose(0, 2, 1, 3)
    v = v.reshape(B, S, num_kv_heads, head_dim).transpose(0, 2, 1, 3)

    kv_seq_len = S  # TODO(synk): past_key_value / KV-cache not supported.
    cos, sin = phi_rotary_cache(rot_dim, kv_seq_len, base=rope_theta,
                                dtype=hidden_states.dtype)
    if position_ids is None:
        position_ids = jnp.broadcast_to(jnp.arange(S, dtype=jnp.int32), (B, S))
    cos_sel = jnp.take(cos, position_ids, axis=0)   # (B, S, rot_dim)
    sin_sel = jnp.take(sin, position_ids, axis=0)

    if attention_mask is None:
        attention_mask = jnp.zeros((B, 1, S, S), dtype=jnp.float32)

    scale = 1.0 / math.sqrt(head_dim)
    attn = phi_attention_core(q, k, v, cos_sel, sin_sel, attention_mask,
                              scale=scale, rot_dim=rot_dim)     # (B, H, S, D)

    attn = attn.transpose(0, 2, 1, 3).reshape(B * S, num_heads * head_dim)
    out = linear_pallas(attn, params["wd"].T, params["bd"])
    return out.reshape(B, S, hidden)


# ----------------------------------------------------------------------------
# Pure-JAX reference (mirrors the PyTorch module)
# ----------------------------------------------------------------------------
def _reference_phi_attention(params, x, mask, position_ids, *, num_heads,
                             num_kv_heads, rope_theta=10000.0,
                             partial_rotary_factor=0.5):
    B, S, hidden = x.shape
    hd = hidden // num_heads
    rot = int(partial_rotary_factor * hd)
    n_rep = num_heads // num_kv_heads

    q = x @ params["wq"].T + params["bq"]
    k = x @ params["wk"].T + params["bk"]
    v = x @ params["wv"].T + params["bv"]
    q = q.reshape(B, S, num_heads, hd).transpose(0, 2, 1, 3)
    k = k.reshape(B, S, num_kv_heads, hd).transpose(0, 2, 1, 3)
    v = v.reshape(B, S, num_kv_heads, hd).transpose(0, 2, 1, 3)

    inv = 1.0 / (rope_theta ** (jnp.arange(0, rot, 2, dtype=jnp.float32) / rot))
    t = jnp.arange(S, dtype=jnp.float32)
    emb = jnp.concatenate([jnp.outer(t, inv)] * 2, axis=-1)
    cos, sin = jnp.cos(emb), jnp.sin(emb)
    cos_g = cos[position_ids][:, None]   # (B,1,S,rot)
    sin_g = sin[position_ids][:, None]

    def rot_half(a):
        h = a.shape[-1] // 2
        return jnp.concatenate([-a[..., h:], a[..., :h]], axis=-1)

    q_rot, q_pass = q[..., :rot], q[..., rot:]
    k_rot, k_pass = k[..., :rot], k[..., rot:]
    q_rot = q_rot * cos_g + rot_half(q_rot) * sin_g
    k_rot = k_rot * cos_g + rot_half(k_rot) * sin_g
    q = jnp.concatenate([q_rot, q_pass], axis=-1)
    k = jnp.concatenate([k_rot, k_pass], axis=-1)

    k = jnp.repeat(k, n_rep, axis=1)
    v = jnp.repeat(v, n_rep, axis=1)

    w = jnp.einsum("bhqd,bhkd->bhqk", q.astype(jnp.float32),
                   k.astype(jnp.float32)) / math.sqrt(hd)
    w = w + mask
    w = jax.nn.softmax(w, axis=-1).astype(v.dtype)
    o = jnp.einsum("bhqk,bhkd->bhqd", w, v)
    o = o.transpose(0, 2, 1, 3).reshape(B, S, num_heads * hd)
    return o @ params["wd"].T + params["bd"]


# ----------------------------------------------------------------------------
if __name__ == "__main__":
    key = jax.random.PRNGKey(0)
    B, S, hidden = 2, 8, 256
    num_heads, num_kv_heads = 4, 2            # GQA path (n_rep = 2)
    head_dim = hidden // num_heads            # 64
    rot_dim = head_dim // 2                   # 32 (partial_rotary_factor = 0.5)

    keys = jax.random.split(key, 9)

    def w(k_, shape):
        return jax.random.normal(k_, shape, jnp.float32) * 0.02

    params = {
        "wq": w(keys[0], (num_heads * head_dim, hidden)),
        "bq": w(keys[1], (num_heads * head_dim,)),
        "wk": w(keys[2], (num_kv_heads * head_dim, hidden)),
        "bk": w(keys[3], (num_kv_heads * head_dim,)),
        "wv": w(keys[4], (num_kv_heads * head_dim, hidden)),
        "bv": w(keys[5], (num_kv_heads * head_dim,)),
        "wd": w(keys[6], (hidden, num_heads * head_dim)),
        "bd": w(keys[7], (hidden,)),
    }
    x = jax.random.normal(keys[8], (B, S, hidden), jnp.float32)

    causal = jnp.triu(jnp.full((S, S), -1e9, dtype=jnp.float32), k=1)
    mask = jnp.broadcast_to(causal, (B, 1, S, S))
    position_ids = jnp.broadcast_to(jnp.arange(S, dtype=jnp.int32), (B, S))

    out = phi_attention_forward(params, x, attention_mask=mask,
                                position_ids=position_ids,
                                num_heads=num_heads, num_kv_heads=num_kv_heads)
    out = jax.block_until_ready(out)

    # --- correctness checks -------------------------------------------------
    assert out.shape == (B, S, hidden) and out.dtype == x.dtype
    assert bool(jnp.all(jnp.isfinite(out)))

    ref = _reference_phi_attention(params, x, mask, position_ids,
                                   num_heads=num_heads,
                                   num_kv_heads=num_kv_heads)
    max_err = float(jnp.max(jnp.abs(out - ref)))
    assert jnp.allclose(out, ref, atol=2e-2, rtol=2e-2), f"max_err={max_err}"

    # rotary cache check against the PyTorch buffer formula
    cos_c, sin_c = phi_rotary_cache(rot_dim, S, base=10000.0, dtype=jnp.float32)
    inv = 1.0 / (10000.0 ** (jnp.arange(0, rot_dim, 2, dtype=jnp.float32) / rot_dim))
    emb = jnp.concatenate(
        [jnp.outer(jnp.arange(S, dtype=jnp.float32), inv)] * 2, axis=-1)
    assert cos_c.shape == (S, rot_dim) and sin_c.shape == (S, rot_dim)
    assert jnp.allclose(cos_c, jnp.cos(emb), atol=1e-5)
    assert jnp.allclose(sin_c, jnp.sin(emb), atol=1e-5)

    print("KERNEL_OK")
</pallas_src>

<mosaic_0001>
module attributes {stable_mosaic.version = 11 : i64} {
  func.func @_linear_kernel(%arg0: i32, %arg1: memref<16x256xf32, #tpu.memory_space<vmem>>, %arg2: memref<256x256xf32, #tpu.memory_space<vmem>>, %arg3: memref<1x256xf32, #tpu.memory_space<vmem>>, %arg4: memref<16x256xf32, #tpu.memory_space<vmem>>) attributes {dimension_semantics = [#tpu.dimension_semantics<parallel>], iteration_bounds = array<i64: 1>, scalar_prefetch = 0 : i64, scratch_operands = 0 : i64, tpu.core_type = #tpu.core_type<tc>, window_params = [{transform_indices = @transform_0, window_bounds = array<i64: 16, 256>}, {pipeline_mode = #tpu.pipeline_mode<synchronous>, transform_indices = @transform_1, window_bounds = array<i64: 256, 256>}, {pipeline_mode = #tpu.pipeline_mode<synchronous>, transform_indices = @transform_2, window_bounds = array<i64: 1, 256>}, {transform_indices = @transform_3, window_bounds = array<i64: 16, 256>}]} {
    %c0 = arith.constant 0 : index
    %c0_0 = arith.constant 0 : index
    %0 = vector.load %arg1[%c0, %c0_0] : memref<16x256xf32, #tpu.memory_space<vmem>>, vector<16x256xf32>
    %c0_1 = arith.constant 0 : index
    %c0_2 = arith.constant 0 : index
    %1 = vector.load %arg2[%c0_1, %c0_2] : memref<256x256xf32, #tpu.memory_space<vmem>>, vector<256x256xf32>
    %cst = arith.constant dense<0.000000e+00> : vector<16x256xf32>
    %2 = tpu.matmul %0, %1, %cst {dimension_numbers = #tpu.dot_dimension_numbers<[1], [0], [0], [1], [0, 0, 1, 1], [], []>} : vector<16x256xf32>, vector<256x256xf32>, vector<16x256xf32> -> vector<16x256xf32>
    %c0_3 = arith.constant 0 : index
    %c0_4 = arith.constant 0 : index
    %3 = vector.load %arg3[%c0_3, %c0_4] : memref<1x256xf32, #tpu.memory_space<vmem>>, vector<1x256xf32>
    %4 = vector.broadcast %3 : vector<1x256xf32> to vector<16x256xf32>
    %5 = arith.addf %2, %4 : vector<16x256xf32>
    %c0_5 = arith.constant 0 : index
    %c0_6 = arith.constant 0 : index
    %6 = vector.load %arg4[%c0_5, %c0_6] : memref<16x256xf32, #tpu.memory_space<vmem>>, vector<16x256xf32>
    tpu.vector_store %arg4[%c0_5, %c0_6], %5 {strides = array<i32>} : memref<16x256xf32, #tpu.memory_space<vmem>>, vector<16x256xf32>,
    return
  }
  func.func @transform_0(%arg0: i32) -> (i32, i32) {
    %c0_i32 = arith.constant 0 : i32
    %c0_i32_0 = arith.constant 0 : i32
    return %arg0, %c0_i32 : i32, i32
  }
  func.func @transform_1(%arg0: i32) -> (i32, i32) {
    %c0_i32 = arith.constant 0 : i32
    %c0_i32_0 = arith.constant 0 : i32
    %c0_i32_1 = arith.constant 0 : i32
    return %c0_i32, %c0_i32_0 : i32, i32
  }
  func.func @transform_2(%arg0: i32) -> (i32, i32) {
    %c0_i32 = arith.constant 0 : i32
    %c0_i32_0 = arith.constant 0 : i32
    %c0_i32_1 = arith.constant 0 : i32
    return %c0_i32, %c0_i32_0 : i32, i32
  }
  func.func @transform_3(%arg0: i32) -> (i32, i32) {
    %c0_i32 = arith.constant 0 : i32
    %c0_i32_0 = arith.constant 0 : i32
    return %arg0, %c0_i32 : i32, i32
  }
}

</mosaic_0001>

<llo_original>
// kernel: tpu_custom_call.1
$region0: #{tpu_custom_call.1}
  #allocation0 [shape = 'u32[]', space=smem, size = 0x4, offset = 0x4, fixed_abs, tag = 'smem constant byte address 0x4 - core index']
  #allocation1 [shape = 'u32[144,128]{1,0:T(1,128)}', space=vmem, size = 0x12000, scoped, tag = 'internal scratch']
  %s0 = inlined_call_operand.hbm [shape: f32[16,256], index: 0, kind: input, shape index: {}]
  %s1 = inlined_call_operand.hbm [shape: f32[256,256], index: 1, kind: input, shape index: {}]
  %s2 = inlined_call_operand.vmem [shape: f32[1,256], index: 2, kind: input, shape index: {}]
  %s3 = inlined_call_operand.hbm [shape: f32[16,256], index: 3, kind: output, shape index: {}]
  %s4 = sld [smem:[#allocation0]]
  $region30: #{tpu_custom_call.1} parent=0
    _
  %s6 = ssub.s32 1, %s4
  %s7 = scalar_select 0, %s6, %s4
  $region1: #{tpu_custom_call.1} parent=0
    #allocation2 [shape = 'u8[16384]{0}', space=vmem, size = 0x4000, scoped, tag = 'input window, operand 0, single buffered']
    #allocation3 [shape = 's32[1]{0}', space=sflag, size = 0x4, scoped, tag = 'scoped memory for tpu_custom_call.1']
    #allocation4 [shape = 's32[1]{0}', space=sflag, size = 0x4, scoped, tag = 'scoped memory for tpu_custom_call.1']
    #allocation5 [shape = 'u8[262144]{0}', space=vmem, size = 0x40000, scoped, tag = 'input window, operand 1, single buffered']
    #allocation6 [shape = 's32[1]{0}', space=sflag, size = 0x4, scoped, tag = 'scoped memory for tpu_custom_call.1']
    #allocation7 [shape = 'u8[16384]{0}', space=vmem, size = 0x4000, scoped, tag = 'output window, operand 0, single buffered']
    %8 = vsyncpa [#allocation3], 0
    %9 = vsyncpa [#allocation6], 0
    %10 = vsyncpa [#allocation4], 0
    // Predicated region
    $region2: #{tpu_custom_call.1} parent=1 // pred_check
      _
    $region3: #{tpu_custom_call.1} parent=1 // pred_check_branch
      %12 = sbr.rel (0) target = $region5
    $region4: #{tpu_custom_call.1} parent=1 // pred_region
      %s14 = ssub.s32 512, 512
      %15 = vsyncadd [#allocation3], %s14
      %s16 = sshll.u32 [#allocation2], 4
      %s17 = int_to_ptr.vmem [resolvable:$true] %s16
      %22 = dma.hbm_to_vmem [thread:$0]  %s0, 512, %s17, [#allocation3], 256, 256, 16
    $region5: #{tpu_custom_call.1} parent=1 // pred_fallthru
      _
    // Predicated region
    $region6: #{tpu_custom_call.1} parent=1 // pred_check
      _
    $region7: #{tpu_custom_call.1} parent=1 // pred_check_branch
      %24 = sbr.rel (0) target = $region9
    $region8: #{tpu_custom_call.1} parent=1 // pred_region
      %s26 = ssub.s32 8192, 8192
      %27 = vsyncadd [#allocation6], %s26
      %s28 = sshll.u32 [#allocation5], 4
      %s29 = int_to_ptr.vmem [resolvable:$true] %s28
      %34 = dma.hbm_to_vmem [thread:$0]  %s1, 8192, %s29, [#allocation6], 256, 256, 16
    $region9: #{tpu_custom_call.1} parent=1 // pred_fallthru
      _
    // Predicated region
    $region10: #{tpu_custom_call.1} parent=1 // pred_check
      _
    $region11: #{tpu_custom_call.1} parent=1 // pred_check_branch
      %36 = sbr.rel (0) target = $region13
    $region12: #{tpu_custom_call.1} parent=1 // pred_region
      _
    $region13: #{tpu_custom_call.1} parent=1 // pred_fallthru
      _
    // Predicated region
    $region14: #{tpu_custom_call.1} parent=1 // pred_check
      _
    $region15: #{tpu_custom_call.1} parent=1 // pred_check_branch
      %38 = sbr.rel (0) target = $region17
    $region16: #{tpu_custom_call.1} parent=1 // pred_region
      %39 = dma.done [#allocation3], 512
    $region17: #{tpu_custom_call.1} parent=1 // pred_fallthru
      _
    // Predicated region
    $region18: #{tpu_custom_call.1} parent=1 // pred_check
      _
    $region19: #{tpu_custom_call.1} parent=1 // pred_check_branch
      %41 = sbr.rel (0) target = $region21
    $region20: #{tpu_custom_call.1} parent=1 // pred_region
      %42 = dma.done [#allocation6], 8192
    $region21: #{tpu_custom_call.1} parent=1 // pred_fallthru
      _
    %v43 = vld [vmem:[#allocation2] sm:$0xff]
    %v44 = vld [vmem:[#allocation2 + $0x8] sm:$0xff]
    %v45 = vld [vmem:[#allocation2 + $0x10] sm:$0xff]
    %v46 = vld [vmem:[#allocation2 + $0x18] sm:$0xff]
    %v47 = vld [vmem:[#allocation5] sm:$0xff]
    %v48 = vld [vmem:[#allocation5 + $0x8] sm:$0xff]
    %v49 = vld [vmem:[#allocation5 + $0x10] sm:$0xff]
    %v50 = vld [vmem:[#allocation5 + $0x18] sm:$0xff]
    %v51 = vld [vmem:[#allocation5 + $0x20] sm:$0xff]
    %v52 = vld [vmem:[#allocation5 + $0x28] sm:$0xff]
    %v53 = vld [vmem:[#allocation5 + $0x30] sm:$0xff]
    %v54 = vld [vmem:[#allocation5 + $0x38] sm:$0xff]
    %v55 = vld [vmem:[#allocation5 + $0x40] sm:$0xff]
    %v56 = vld [vmem:[#allocation5 + $0x48] sm:$0xff]
    %v57 = vld [vmem:[#allocation5 + $0x50] sm:$0xff]
    %v58 = vld [vmem:[#allocation5 + $0x58] sm:$0xff]
    %v59 = vld [vmem:[#allocation5 + $0x60] sm:$0xff]
    %v60 = vld [vmem:[#allocation5 + $0x68] sm:$0xff]
    %v61 = vld [vmem:[#allocation5 + $0x70] sm:$0xff]
    %v62 = vld [vmem:[#allocation5 + $0x78] sm:$0xff]
    %v63 = vld [vmem:[#allocation5 + $0x80] sm:$0xff]
    %v64 = vld [vmem:[#allocation5 + $0x88] sm:$0xff]
    %v65 = vld [vmem:[#allocation5 + $0x90] sm:$0xff]
    %v66 = vld [vmem:[#allocation5 + $0x98] sm:$0xff]
    %v67 = vld [vmem:[#allocation5 + $0xa0] sm:$0xff]
    %v68 = vld [vmem:[#allocation5 + $0xa8] sm:$0xff]
    %v69 = vld [vmem:[#allocation5 + $0xb0] sm:$0xff]
    %v70 = vld [vmem:[#allocation5 + $0xb8] sm:$0xff]
    %v71 = vld [vmem:[#allocation5 + $0xc0] sm:$0xff]
    %v72 = vld [vmem:[#allocation5 + $0xc8] sm:$0xff]
    %v73 = vld [vmem:[#allocation5 + $0xd0] sm:$0xff]
    %v74 = vld [vmem:[#allocation5 + $0xd8] sm:$0xff]
    %v75 = vld [vmem:[#allocation5 + $0xe0] sm:$0xff]
    %v76 = vld [vmem:[#allocation5 + $0xe8] sm:$0xff]
    %v77 = vld [vmem:[#allocation5 + $0xf0] sm:$0xff]
    %v78 = vld [vmem:[#allocation5 + $0xf8] sm:$0xff]
    %v79 = vld [vmem:[#allocation5 + $0x100] sm:$0xff]
    %v80 = vld [vmem:[#allocation5 + $0x108] sm:$0xff]
    %v81 = vld [vmem:[#allocation5 + $0x110] sm:$0xff]
    %v82 = vld [vmem:[#allocation5 + $0x118] sm:$0xff]
    %v83 = vld [vmem:[#allocation5 + $0x120] sm:$0xff]
    %v84 = vld [vmem:[#allocation5 + $0x128] sm:$0xff]
    %v85 = vld [vmem:[#allocation5 + $0x130] sm:$0xff]
    %v86 = vld [vmem:[#allocation5 + $0x138] sm:$0xff]
    %v87 = vld [vmem:[#allocation5 + $0x140] sm:$0xff]
    %v88 = vld [vmem:[#allocation5 + $0x148] sm:$0xff]
    %v89 = vld [vmem:[#allocation5 + $0x150] sm:$0xff]
    %v90 = vld [vmem:[#allocation5 + $0x158] sm:$0xff]
    %v91 = vld [vmem:[#allocation5 + $0x160] sm:$0xff]
    %v92 = vld [vmem:[#allocation5 + $0x168] sm:$0xff]
    %v93 = vld [vmem:[#allocation5 + $0x170] sm:$0xff]
    %v94 = vld [vmem:[#allocation5 + $0x178] sm:$0xff]
    %v95 = vld [vmem:[#allocation5 + $0x180] sm:$0xff]
    %v96 = vld [vmem:[#allocation5 + $0x188] sm:$0xff]
    %v97 = vld [vmem:[#allocation5 + $0x190] sm:$0xff]
    %v98 = vld [vmem:[#allocation5 + $0x198] sm:$0xff]
    %v99 = vld [vmem:[#allocation5 + $0x1a0] sm:$0xff]
    %v100 = vld [vmem:[#allocation5 + $0x1a8] sm:$0xff]
    %v101 = vld [vmem:[#allocation5 + $0x1b0] sm:$0xff]
    %v102 = vld [vmem:[#allocation5 + $0x1b8] sm:$0xff]
    %v103 = vld [vmem:[#allocation5 + $0x1c0] sm:$0xff]
    %v104 = vld [vmem:[#allocation5 + $0x1c8] sm:$0xff]
    %v105 = vld [vmem:[#allocation5 + $0x1d0] sm:$0xff]
    %v106 = vld [vmem:[#allocation5 + $0x1d8] sm:$0xff]
    %v107 = vld [vmem:[#allocation5 + $0x1e0] sm:$0xff]
    %v108 = vld [vmem:[#allocation5 + $0x1e8] sm:$0xff]
    %v109 = vld [vmem:[#allocation5 + $0x1f0] sm:$0xff]
    %v110 = vld [vmem:[#allocation5 + $0x1f8] sm:$0xff]
    %v111 = vld [vmem:[%s2] sm:$0x3]
    %v113 = vlaneseq
    %v114 = vshrl.u32 %v113, 7
    %v115 = vsub.s32 0, %v114
    %v116 = vrot.slane %v111, %v115
    %v117 = vlaneseq
    %v118 = vshrl.u32 %v117, 7
    %v119 = vsub.s32 1, %v118
    %v120 = vrot.slane %v111, %v119
    %123 = vmatprep.subr.mxu0 %v48
    %124 = vmatpush1.msra.mxu0 %v47
    %125 = vmatprep.subr.mxu0 %v50
    %126 = vmatpush1.msra.mxu0 %v49
    %127 = vmatprep.subr.mxu0 %v52
    %128 = vmatpush1.msra.mxu0 %v51
    %129 = vmatprep.subr.mxu0 %v54
    %130 = vmatpush1.msra.mxu0 %v53
    %131 = vmatprep.subr.mxu0 %v56
    %132 = vmatpush1.msra.mxu0 %v55
    %133 = vmatprep.subr.mxu0 %v58
    %134 = vmatpush1.msra.mxu0 %v57
    %135 = vmatprep.subr.mxu0 %v60
    %136 = vmatpush1.msra.mxu0 %v59
    %137 = vmatprep.subr.mxu0 %v62
    %138 = vmatpush1.msra.mxu0 %v61
    %139 = vmatprep.subr.mxu0 %v64
    %140 = vmatpush1.msra.mxu0 %v63
    %141 = vmatprep.subr.mxu0 %v66
    %142 = vmatpush1.msra.mxu0 %v65
    %143 = vmatprep.subr.mxu0 %v68
    %144 = vmatpush1.msra.mxu0 %v67
    %145 = vmatprep.subr.mxu0 %v70
    %146 = vmatpush1.msra.mxu0 %v69
    %147 = vmatprep.subr.mxu0 %v72
    %148 = vmatpush1.msra.mxu0 %v71
    %149 = vmatprep.subr.mxu0 %v74
    %150 = vmatpush1.msra.mxu0 %v73
    %151 = vmatprep.subr.mxu0 %v76
    %152 = vmatpush1.msra.mxu0 %v75
    %153 = vmatprep.subr.mxu0 %v78
    %154 = vmatpush1.msra.mxu0 %v77
    %155 = vmatprep.subr.mxu0 %v80
    %156 = vmatpush1.msra.mxu0 %v79
    %157 = vmatprep.subr.mxu0 %v82
    %158 = vmatpush1.msra.mxu0 %v81
    %159 = vmatprep.subr.mxu0 %v84
    %160 = vmatpush1.msra.mxu0 %v83
    %161 = vmatprep.subr.mxu0 %v86
    %162 = vmatpush1.msra.mxu0 %v85
    %163 = vmatprep.subr.mxu0 %v88
    %164 = vmatpush1.msra.mxu0 %v87
    %165 = vmatprep.subr.mxu0 %v90
    %166 = vmatpush1.msra.mxu0 %v89
    %167 = vmatprep.subr.mxu0 %v92
    %168 = vmatpush1.msra.mxu0 %v91
    %169 = vmatprep.subr.mxu0 %v94
    %170 = vmatpush1.msra.mxu0 %v93
    %171 = vmatprep.subr.mxu0 %v96
    %172 = vmatpush1.msra.mxu0 %v95
    %173 = vmatprep.subr.mxu0 %v98
    %174 = vmatpush1.msra.mxu0 %v97
    %175 = vmatprep.subr.mxu0 %v100
    %176 = vmatpush1.msra.mxu0 %v99
    %177 = vmatprep.subr.mxu0 %v102
    %178 = vmatpush1.msra.mxu0 %v101
    %179 = vmatprep.subr.mxu0 %v104
    %180 = vmatpush1.msra.mxu0 %v103
    %181 = vmatprep.subr.mxu0 %v106
    %182 = vmatpush1.msra.mxu0 %v105
    %183 = vmatprep.subr.mxu0 %v108
    %184 = vmatpush1.msra.mxu0 %v107
    %185 = vmatprep.subr.mxu0 %v110
    %186 = vmatpush1.msra.mxu0 %v109
    %187 = vmatprep.mubr.f32.mxu0 %v44
    %188 = vmatmul.mubr.f32.gmra.mrb[0].mxu0 %v43
    %v189 = vpop.f32.mrb[0].mxu0
    %v190 = vadd.f32 %v116, %v189
    %v191 = vpop.f32.mrb[0].mxu0
    %v192 = vadd.f32 %v120, %v191
    %193 = vmatprep.mubr.f32.mxu0 %v46
    %194 = vmatmul.mubr.f32.gmra.mrb[0].mxu0 %v45
    %v195 = vpop.f32.mrb[0].mxu0
    %v196 = vadd.f32 %v116, %v195
    %v197 = vpop.f32.mrb[0].mxu0
    %v198 = vadd.f32 %v120, %v197
    %199 = vdwg.mxu0
    %200 = vst [vmem:[#allocation7] sm:$0xff] %v190
    %201 = vst [vmem:[#allocation7 + $0x8] sm:$0xff] %v192
    %202 = vst [vmem:[#allocation7 + $0x10] sm:$0xff] %v196
    %203 = vst [vmem:[#allocation7 + $0x18] sm:$0xff] %v198
    // Predicated region
    $region22: #{tpu_custom_call.1} parent=1 // pred_check
      _
    $region23: #{tpu_custom_call.1} parent=1 // pred_check_branch
      %205 = sbr.rel (0) target = $region25
    $region24: #{tpu_custom_call.1} parent=1 // pred_region
      %s207 = ssub.s32 512, 512
      %208 = vsyncadd [#allocation4], %s207
      %s209 = sshll.u32 [#allocation7], 4
      %s210 = int_to_ptr.vmem [resolvable:$true] %s209
      %215 = dma.vmem_to_hbm [thread:$0]  %s210, 512, %s3, [#allocation4], 256, 256, 16
    $region25: #{tpu_custom_call.1} parent=1 // pred_fallthru
      _
    // Predicated region
    $region26: #{tpu_custom_call.1} parent=1 // pred_check
      _
    $region27: #{tpu_custom_call.1} parent=1 // pred_check_branch
      %217 = sbr.rel (0) target = $region29
    $region28: #{tpu_custom_call.1} parent=1 // pred_region
      %218 = dma.done [#allocation4], 512
    $region29: #{tpu_custom_call.1} parent=1 // pred_fallthru
      _
    %219 = vsyncpa [#allocation3], 1
    %220 = vsyncpa [#allocation6], 1
    %221 = vsyncpa [#allocation4], 1

</llo_original>
